<compile_context>
chip_gen: v7x
topology: tpu7x:2x2x1
jax: 0.10.0
libtpu: 0.0.40
codegen_flags: <defaults>
</compile_context>

<pallas_src>
import functools
import math

import jax
import jax.numpy as jnp
from jax.experimental import pallas as pl
from jax.experimental.pallas import tpu as pltpu


def _round_up(x: int, m: int) -> int:
    return ((x + m - 1) // m) * m


def _choose_tile_h(h: int) -> int:
    """Lane-axis tile. Forces >= 2 tiles when H >= 256 (v7x megacore split)."""
    if h % 128 != 0:
        return h          # full-extent block is legal; narrow H handled upstream
    if h < 256:
        return h          # single 128-wide tile
    cap = (min(2048, h // 2) // 128) * 128
    for cand in range(cap, 0, -128):
        if h % cand == 0:
            return cand
    return 128            # h is a multiple of 128, so this always divides


def _choose_tile_n(n: int, tile_h: int, dtype_bytes: int) -> int:
    """Sublane-axis tile: packed-sublane aligned, ~6 MiB per pipeline buffer."""
    sub = max(8, 32 // max(1, dtype_bytes))   # 8 f32 / 16 bf16 / 32 int8|fp8
    per_buffer_budget = 6 * 1024 * 1024       # x2 double-buffered: fits v7x too
    max_rows = per_buffer_budget // max(1, tile_h * dtype_bytes)
    max_rows = max((max_rows // sub) * sub, sub)
    return min(_round_up(n, sub), max_rows)


def _readout_kernel(x_ref, o_ref, acc_ref, *, n_rows, tile_n, needs_mask,
                    scale, apply_sigmoid):
    # Grid = (H_tiles, N_tiles); N (reduction) is the LAST axis.
    k = pl.program_id(1)
    last = pl.num_programs(1) - 1

    @pl.when(k == 0)
    def _init():
        acc_ref[...] = jnp.zeros_like(acc_ref)

    def _accumulate(x):
        # Column sums on the (otherwise idle) MXU: (1, tn) @ (tn, th) -> f32.
        ones = jnp.ones((1, tile_n), dtype=x.dtype)
        acc_ref[...] += jnp.dot(ones, x, preferred_element_type=jnp.float32)

    if needs_mask:
        # Masking gated to the final N step only; other steps stay DMA-bound.
        @pl.when(k != last)
        def _body():
            _accumulate(x_ref[...])

        @pl.when(k == last)
        def _body_masked():
            x = x_ref[...]
            row = jax.lax.broadcasted_iota(jnp.int32, x.shape, 0) + k * tile_n
            _accumulate(jnp.where(row < n_rows, x, jnp.zeros_like(x)))
    else:
        _accumulate(x_ref[...])

    @pl.when(k == last)
    def _finalize():
        mean = acc_ref[...] * scale                      # single scale at finalize
        if apply_sigmoid:
            mean = pl.reciprocal(1.0 + jnp.exp(-mean))   # exp on EUP, exact recip
        o_ref[...] = mean.astype(o_ref.dtype)


def _readout_pallas(x, *, scale, apply_sigmoid, out_dtype,
                    tile_n=None, tile_h=None):
    """x: [N, H] -> (1, H) = (optionally sigmoid of) scale * column sums."""
    n, h = x.shape
    dtype_bytes = jnp.dtype(x.dtype).itemsize

    th = tile_h if tile_h is not None else _choose_tile_h(h)
    assert th == h or (h % th == 0 and th % 128 == 0), (
        f"tile_h={th} must equal H or be a 128-multiple dividing H={h}")
    tn = tile_n if tile_n is not None else _choose_tile_n(n, th, dtype_bytes)
    assert tn % 8 == 0, f"tile_n={tn} must be a multiple of 8"

    grid = (pl.cdiv(h, th), pl.cdiv(n, tn))   # (parallel H, arbitrary N-last)

    kernel = functools.partial(
        _readout_kernel,
        n_rows=n, tile_n=tn, needs_mask=(n % tn) != 0,
        scale=scale, apply_sigmoid=apply_sigmoid)

    # TODO(synk): optionally sweep pipeline_mode=pl.Buffered(3) on the input
    # BlockSpec; default double-buffering already hides DMA at ~6 MiB tiles.
    return pl.pallas_call(
        kernel,
        out_shape=jax.ShapeDtypeStruct((1, h), out_dtype),
        grid_spec=pltpu.PrefetchScalarGridSpec(
            num_scalar_prefetch=0,
            grid=grid,
            in_specs=[pl.BlockSpec((tn, th), lambda hi, ki: (ki, hi))],
            # Output block is constant across the N axis -> resident target,
            # written only at the final N step.
            out_specs=pl.BlockSpec((1, th), lambda hi, ki: (0, hi)),
            scratch_shapes=[pltpu.VMEM((1, th), jnp.float32)],
        ),
        compiler_params=pltpu.CompilerParams(
            dimension_semantics=("parallel", "arbitrary"),
            vmem_limit_bytes=32 * 1024 * 1024,   # safe on v7x's 64 MiB VMEM
        ),
    )(x)


def readout(feats: jax.Array, *, tile_n: int | None = None,
            tile_h: int | None = None) -> jax.Array:
    """feats: [N, H] -> sigmoid(mean over N): [H]."""
    n, h = feats.shape

    # Narrow / non-128-multiple H: fold rows into the lane axis for full lane
    # density and unmasked lane-dense stores; finish the tiny [r, H] fold +
    # sigmoid in XLA.
    if tile_h is None and h % 128 != 0:
        r = 128 // math.gcd(h, 128)          # smallest r with (r*h) % 128 == 0
        if r > 1 and n % r == 0:
            folded = feats.reshape(n // r, r * h)
            partial = _readout_pallas(
                folded, scale=1.0 / n, apply_sigmoid=False,
                out_dtype=jnp.float32, tile_n=tile_n)
            mean = partial.reshape(r, h).sum(axis=0)
            return jax.nn.sigmoid(mean).astype(feats.dtype)

    out = _readout_pallas(
        feats, scale=1.0 / n, apply_sigmoid=True,
        out_dtype=feats.dtype, tile_n=tile_n, tile_h=tile_h)
    return out[0]   # squeeze to [H] to match torch.mean(feats, 0) shape


def readout_ref(feats: jax.Array) -> jax.Array:
    return jax.nn.sigmoid(jnp.mean(feats, axis=0))


if __name__ == "__main__":
    # 1) Shape implied by the module (seq=8, hidden=32): narrow-H folded path.
    n, h = 8, 32
    feats = jax.random.normal(jax.random.PRNGKey(0), (n, h), dtype=jnp.float32)
    out = jax.block_until_ready(readout(feats))
    ref = readout_ref(feats)
    assert out.shape == (h,), out.shape
    assert jnp.allclose(out, ref, atol=1e-5, rtol=1e-5), (
        f"max err {float(jnp.max(jnp.abs(out - ref)))}")

    # 2) Multi-tile ragged case: 3 N tiles of 128 over 300 rows (accumulator
    #    reset + last-tile-only masking) and 2 parallel H tiles of 128.
    n2, h2 = 300, 256
    feats2 = jax.random.normal(jax.random.PRNGKey(1), (n2, h2), dtype=jnp.float32)
    out2 = jax.block_until_ready(readout(feats2, tile_n=128, tile_h=128))
    ref2 = readout_ref(feats2)
    assert out2.shape == (h2,), out2.shape
    assert jnp.allclose(out2, ref2, atol=1e-5, rtol=1e-5), (
        f"max err {float(jnp.max(jnp.abs(out2 - ref2)))}")

    # 3) bf16 auto-tiled case: packed-sublane rounding (16) + >=2 parallel H
    #    tiles + MXU ones-vector reduce with f32 accumulation.
    n3, h3 = 300, 384
    feats3 = jax.random.normal(
        jax.random.PRNGKey(2), (n3, h3), dtype=jnp.float32).astype(jnp.bfloat16)
    out3 = jax.block_until_ready(readout(feats3))
    ref3 = jax.nn.sigmoid(jnp.mean(feats3.astype(jnp.float32), axis=0))
    assert out3.shape == (h3,), out3.shape
    assert jnp.allclose(out3.astype(jnp.float32), ref3, atol=1e-2, rtol=1e-2), (
        f"max err {float(jnp.max(jnp.abs(out3.astype(jnp.float32) - ref3)))}")

    print("KERNEL_OK")
</pallas_src>

<mosaic_0001>
module attributes {stable_mosaic.version = 11 : i64} {
  func.func @_readout_kernel(%arg0: i32, %arg1: i32, %arg2: memref<8x128xf32, #tpu.memory_space<vmem>>, %arg3: memref<1x128xf32, #tpu.memory_space<vmem>>, %arg4: memref<1x128xf32, #tpu.memory_space<vmem>>) attributes {dimension_semantics = [#tpu.dimension_semantics<parallel>, #tpu.dimension_semantics<arbitrary>], iteration_bounds = array<i64: 1, 1>, scalar_prefetch = 0 : i64, scratch_operands = 1 : i64, tpu.core_type = #tpu.core_type<tc>, window_params = [{transform_indices = @transform_0, window_bounds = array<i64: 8, 128>}, {transform_indices = @transform_1, window_bounds = array<i64: 1, 128>}]} {
    %c0_i32 = arith.constant 0 : i32
    %0 = arith.cmpi eq, %arg1, %c0_i32 : i32
    %1 = arith.extui %0 : i1 to i32
    %c0_i32_0 = arith.constant 0 : i32
    %2 = arith.cmpi ne, %1, %c0_i32_0 : i32
    scf.if %2 {
      %cst = arith.constant 0.000000e+00 : f32
      %12 = vector.broadcast %cst : f32 to vector<1x128xf32>
      %c0 = arith.constant 0 : index
      %c0_7 = arith.constant 0 : index
      %13 = vector.load %arg4[%c0, %c0_7] : memref<1x128xf32, #tpu.memory_space<vmem>>, vector<1x128xf32>
      tpu.vector_store %arg4[%c0, %c0_7], %12 {strides = array<i32>} : memref<1x128xf32, #tpu.memory_space<vmem>>, vector<1x128xf32>,
    } else {
    }
    %c0_i32_1 = arith.constant 0 : i32
    %3 = arith.cmpi ne, %arg1, %c0_i32_1 : i32
    %4 = arith.extui %3 : i1 to i32
    %c0_i32_2 = arith.constant 0 : i32
    %5 = arith.cmpi ne, %4, %c0_i32_2 : i32
    scf.if %5 {
      %c0 = arith.constant 0 : index
      %c0_7 = arith.constant 0 : index
      %12 = vector.load %arg2[%c0, %c0_7] : memref<8x128xf32, #tpu.memory_space<vmem>>, vector<8x128xf32>
      %cst = arith.constant 1.000000e+00 : f32
      %13 = vector.broadcast %cst : f32 to vector<1x8xf32>
      %c0_8 = arith.constant 0 : index
      %c0_9 = arith.constant 0 : index
      %14 = vector.load %arg4[%c0_8, %c0_9] : memref<1x128xf32, #tpu.memory_space<vmem>>, vector<1x128xf32>
      %cst_10 = arith.constant dense<0.000000e+00> : vector<1x128xf32>
      %15 = tpu.matmul %13, %12, %cst_10 {dimension_numbers = #tpu.dot_dimension_numbers<[1], [0], [0], [1], [0, 0, 1, 1], [], []>} : vector<1x8xf32>, vector<8x128xf32>, vector<1x128xf32> -> vector<1x128xf32>
      %16 = arith.addf %14, %15 : vector<1x128xf32>
      %c0_11 = arith.constant 0 : index
      %c0_12 = arith.constant 0 : index
      %17 = vector.load %arg4[%c0_11, %c0_12] : memref<1x128xf32, #tpu.memory_space<vmem>>, vector<1x128xf32>
      tpu.vector_store %arg4[%c0_11, %c0_12], %16 {strides = array<i32>} : memref<1x128xf32, #tpu.memory_space<vmem>>, vector<1x128xf32>,
    } else {
    }
    %c0_i32_3 = arith.constant 0 : i32
    %6 = arith.cmpi eq, %arg1, %c0_i32_3 : i32
    %7 = arith.extui %6 : i1 to i32
    %c0_i32_4 = arith.constant 0 : i32
    %8 = arith.cmpi ne, %7, %c0_i32_4 : i32
    scf.if %8 {
      %c0 = arith.constant 0 : index
      %c0_7 = arith.constant 0 : index
      %12 = vector.load %arg2[%c0, %c0_7] : memref<8x128xf32, #tpu.memory_space<vmem>>, vector<8x128xf32>
      %13 = tpu.iota {dimensions = array<i32: 0>} : vector<8x128xi32>
      %c8_i32 = arith.constant 8 : i32
      %14 = arith.muli %arg1, %c8_i32 : i32
      %15 = vector.broadcast %14 : i32 to vector<8x128xi32>
      %16 = arith.addi %13, %15 : vector<8x128xi32>
      %c2_i32 = arith.constant 2 : i32
      %17 = vector.broadcast %c2_i32 : i32 to vector<8x128xi32>
      %18 = arith.cmpi slt, %16, %17 : vector<8x128xi32>
      %cst = arith.constant 0.000000e+00 : f32
      %19 = vector.broadcast %cst : f32 to vector<8x128xf32>
      %20 = arith.select %18, %12, %19 : vector<8x128xi1>, vector<8x128xf32>
      %cst_8 = arith.constant 1.000000e+00 : f32
      %21 = vector.broadcast %cst_8 : f32 to vector<1x8xf32>
      %c0_9 = arith.constant 0 : index
      %c0_10 = arith.constant 0 : index
      %22 = vector.load %arg4[%c0_9, %c0_10] : memref<1x128xf32, #tpu.memory_space<vmem>>, vector<1x128xf32>
      %cst_11 = arith.constant dense<0.000000e+00> : vector<1x128xf32>
      %23 = tpu.matmul %21, %20, %cst_11 {dimension_numbers = #tpu.dot_dimension_numbers<[1], [0], [0], [1], [0, 0, 1, 1], [], []>} : vector<1x8xf32>, vector<8x128xf32>, vector<1x128xf32> -> vector<1x128xf32>
      %24 = arith.addf %22, %23 : vector<1x128xf32>
      %c0_12 = arith.constant 0 : index
      %c0_13 = arith.constant 0 : index
      %25 = vector.load %arg4[%c0_12, %c0_13] : memref<1x128xf32, #tpu.memory_space<vmem>>, vector<1x128xf32>
      tpu.vector_store %arg4[%c0_12, %c0_13], %24 {strides = array<i32>} : memref<1x128xf32, #tpu.memory_space<vmem>>, vector<1x128xf32>,
    } else {
    }
    %c0_i32_5 = arith.constant 0 : i32
    %9 = arith.cmpi eq, %arg1, %c0_i32_5 : i32
    %10 = arith.extui %9 : i1 to i32
    %c0_i32_6 = arith.constant 0 : i32
    %11 = arith.cmpi ne, %10, %c0_i32_6 : i32
    scf.if %11 {
      %c0 = arith.constant 0 : index
      %c0_7 = arith.constant 0 : index
      %12 = vector.load %arg4[%c0, %c0_7] : memref<1x128xf32, #tpu.memory_space<vmem>>, vector<1x128xf32>
      %cst = arith.constant 1.250000e-01 : f32
      %13 = vector.broadcast %cst : f32 to vector<1x128xf32>
      %14 = arith.mulf %12, %13 : vector<1x128xf32>
      %c0_8 = arith.constant 0 : index
      %c0_9 = arith.constant 0 : index
      %15 = vector.load %arg3[%c0_8, %c0_9] : memref<1x128xf32, #tpu.memory_space<vmem>>, vector<1x128xf32>
      tpu.vector_store %arg3[%c0_8, %c0_9], %14 {strides = array<i32>} : memref<1x128xf32, #tpu.memory_space<vmem>>, vector<1x128xf32>,
    } else {
    }
    return
  }
  func.func @transform_0(%arg0: i32, %arg1: i32) -> (i32, i32) {
    %c0_i32 = arith.constant 0 : i32
    return %arg1, %arg0 : i32, i32
  }
  func.func @transform_1(%arg0: i32, %arg1: i32) -> (i32, i32) {
    %c0_i32 = arith.constant 0 : i32
    %c0_i32_0 = arith.constant 0 : i32
    return %c0_i32, %arg0 : i32, i32
  }
}

</mosaic_0001>

<llo_original>
// kernel: tpu_custom_call.1
$region0: #{tpu_custom_call.1}
  #allocation0 [shape = 'u32[]', space=smem, size = 0x4, offset = 0x4, fixed_abs, tag = 'smem constant byte address 0x4 - core index']
  #allocation1 [shape = 'u32[144,128]{1,0:T(1,128)}', space=vmem, size = 0x12000, scoped, tag = 'internal scratch']
  #allocation2 [shape = 'f32[1,128]{1,0:T(1,128)}', space=vmem, size = 0x200, scoped, tag = 'scratch operand']
  %s0 = inlined_call_operand.hbm [shape: f32[2,128], index: 0, kind: input, shape index: {}]
  %s1 = inlined_call_operand.hbm [shape: f32[1,128], index: 1, kind: output, shape index: {}]
  %s2 = sld [smem:[#allocation0]]
  $region30: #{tpu_custom_call.1} parent=0
    _
  %s4 = ssub.s32 1, %s2
  %s5 = scalar_select 0, %s4, %s2
  $region1: #{tpu_custom_call.1} parent=0
    #allocation3 [shape = 'u8[4096]{0}', space=vmem, size = 0x1000, scoped, tag = 'input window, operand 0, single buffered']
    #allocation4 [shape = 's32[1]{0}', space=sflag, size = 0x4, scoped, tag = 'scoped memory for tpu_custom_call.1']
    #allocation5 [shape = 's32[1]{0}', space=sflag, size = 0x4, scoped, tag = 'scoped memory for tpu_custom_call.1']
    #allocation6 [shape = 'u8[512]{0}', space=vmem, size = 0x400, scoped, tag = 'output window, operand 0, single buffered']
    %6 = vsyncpa [#allocation4], 0
    %7 = vsyncpa [#allocation5], 0
    // Predicated region
    $region2: #{tpu_custom_call.1} parent=1 // pred_check
      _
    $region3: #{tpu_custom_call.1} parent=1 // pred_check_branch
      %9 = sbr.rel (0) target = $region5
    $region4: #{tpu_custom_call.1} parent=1 // pred_region
      %s11 = ssub.s32 128, 32
      %12 = vsyncadd [#allocation4], %s11
      %s13 = sshll.u32 [#allocation3], 4
      %s14 = int_to_ptr.vmem [resolvable:$true] %s13
      %19 = dma.hbm_to_vmem [thread:$0]  %s0, 32, %s14, [#allocation4], 32, 32, 2
    $region5: #{tpu_custom_call.1} parent=1 // pred_fallthru
      _
    // Predicated region
    $region6: #{tpu_custom_call.1} parent=1 // pred_check
      _
    $region7: #{tpu_custom_call.1} parent=1 // pred_check_branch
      %21 = sbr.rel (0) target = $region9
    $region8: #{tpu_custom_call.1} parent=1 // pred_region
      %22 = dma.done [#allocation4], 128
    $region9: #{tpu_custom_call.1} parent=1 // pred_fallthru
      _
    %p23 = scmp.eq.s32.totalorder 0, 0
    // Predicated region
    $region10: #{tpu_custom_call.1} parent=1 // pred_check
      %p24 = pneg %p23
    $region11: #{tpu_custom_call.1} parent=1 // pred_check_branch
      %26 = sbr.rel (%p24) target = $region13
    $region12: #{tpu_custom_call.1} parent=1 // pred_region
      %27 = vst [vmem:[#allocation2] sm:$0x1] 0.0
    $region13: #{tpu_custom_call.1} parent=1 // pred_fallthru
      _
    %p28 = scmp.ne.s32.totalorder 0, 0
    // Predicated region
    $region14: #{tpu_custom_call.1} parent=1 // pred_check
      %p29 = pneg %p28
    $region15: #{tpu_custom_call.1} parent=1 // pred_check_branch
      %31 = sbr.rel (%p29) target = $region17
    $region16: #{tpu_custom_call.1} parent=1 // pred_region
      %v32 = vld [vmem:[#allocation3] sm:$0xff]
      %v33 = vld [vmem:[#allocation2] sm:$0x1]
      %vm34 = vcmask 64512
      %v36 = vsel %vm34, 1.0, 0
      %38 = vmatprep.subr.mxu0 0.0
      %39 = vmatpush1.msra.mxu0 %v32
      %40 = vmatprep.subr.mxu0 0.0
      %41 = vmatpush1.msra.mxu0 0.0
      %42 = vmatprep.subr.mxu0 0.0
      %43 = vmatpush1.msra.mxu0 0.0
      %44 = vmatprep.subr.mxu0 0.0
      %45 = vmatpush1.msra.mxu0 0.0
      %46 = vmatprep.subr.mxu0 0.0
      %47 = vmatpush1.msra.mxu0 0.0
      %48 = vmatprep.subr.mxu0 0.0
      %49 = vmatpush1.msra.mxu0 0.0
      %50 = vmatprep.subr.mxu0 0.0
      %51 = vmatpush1.msra.mxu0 0.0
      %52 = vmatprep.subr.mxu0 0.0
      %53 = vmatpush1.msra.mxu0 0.0
      %54 = vmatprep.subr.mxu0 0.0
      %55 = vmatpush1.msra.mxu0 0.0
      %56 = vmatprep.subr.mxu0 0.0
      %57 = vmatpush1.msra.mxu0 0.0
      %58 = vmatprep.subr.mxu0 0.0
      %59 = vmatpush1.msra.mxu0 0.0
      %60 = vmatprep.subr.mxu0 0.0
      %61 = vmatpush1.msra.mxu0 0.0
      %62 = vmatprep.subr.mxu0 0.0
      %63 = vmatpush1.msra.mxu0 0.0
      %64 = vmatprep.subr.mxu0 0.0
      %65 = vmatpush1.msra.mxu0 0.0
      %66 = vmatprep.subr.mxu0 0.0
      %67 = vmatpush1.msra.mxu0 0.0
      %68 = vmatprep.subr.mxu0 0.0
      %69 = vmatpush1.msra.mxu0 0.0
      %70 = vmatprep.subr.mxu0 0.0
      %71 = vmatpush1.msra.mxu0 0.0
      %72 = vmatprep.subr.mxu0 0.0
      %73 = vmatpush1.msra.mxu0 0.0
      %74 = vmatprep.subr.mxu0 0.0
      %75 = vmatpush1.msra.mxu0 0.0
      %76 = vmatprep.subr.mxu0 0.0
      %77 = vmatpush1.msra.mxu0 0.0
      %78 = vmatprep.subr.mxu0 0.0
      %79 = vmatpush1.msra.mxu0 0.0
      %80 = vmatprep.subr.mxu0 0.0
      %81 = vmatpush1.msra.mxu0 0.0
      %82 = vmatprep.subr.mxu0 0.0
      %83 = vmatpush1.msra.mxu0 0.0
      %84 = vmatprep.subr.mxu0 0.0
      %85 = vmatpush1.msra.mxu0 0.0
      %86 = vmatprep.subr.mxu0 0.0
      %87 = vmatpush1.msra.mxu0 0.0
      %88 = vmatprep.subr.mxu0 0.0
      %89 = vmatpush1.msra.mxu0 0.0
      %90 = vmatprep.subr.mxu0 0.0
      %91 = vmatpush1.msra.mxu0 0.0
      %92 = vmatprep.subr.mxu0 0.0
      %93 = vmatpush1.msra.mxu0 0.0
      %94 = vmatprep.subr.mxu0 0.0
      %95 = vmatpush1.msra.mxu0 0.0
      %96 = vmatprep.subr.mxu0 0.0
      %97 = vmatpush1.msra.mxu0 0.0
      %98 = vmatprep.subr.mxu0 0.0
      %99 = vmatpush1.msra.mxu0 0.0
      %100 = vmatprep.subr.mxu0 0.0
      %101 = vmatpush1.msra.mxu0 0.0
      %102 = vmatprep.mubr.f32.mxu0 0.0
      %103 = vmatmul.mubr.f32.gmra.mrb[0].mxu0 %v36
      %v104 = vpop.f32.mrb[0].mxu0
      %v105 = vadd.f32 0.0, %v104
      %v106 = vpop.f32.mrb[0].mxu0
      %107 = vdwg.mxu0
      %v108 = vadd.f32 %v33, %v105
      %109 = vst [vmem:[#allocation2] sm:$0x1] %v108
    $region17: #{tpu_custom_call.1} parent=1 // pred_fallthru
      _
    // Predicated region
    $region18: #{tpu_custom_call.1} parent=1 // pred_check
      %p110 = pneg %p23
    $region19: #{tpu_custom_call.1} parent=1 // pred_check_branch
      %112 = sbr.rel (%p110) target = $region21
    $region20: #{tpu_custom_call.1} parent=1 // pred_region
      %v113 = vld [vmem:[#allocation3] sm:$0xff]
      %v114 = vlaneseq
      %v115 = vshrl.u32 %v114, 7
      %s116 = smul.u32 0, 8
      %v117 = vstv %s116
      %v118 = vadd.s32 %v115, %v117
      %vm119 = vcmp.lt.s32.totalorder %v118, 2
      %v120 = vsel %vm119, %v113, 0.0
      %v121 = vld [vmem:[#allocation2] sm:$0x1]
      %vm122 = vcmask 64512
      %v124 = vsel %vm122, 1.0, 0
      %126 = vmatprep.subr.mxu0 0.0
      %127 = vmatpush1.msra.mxu0 %v120
      %128 = vmatprep.subr.mxu0 0.0
      %129 = vmatpush1.msra.mxu0 0.0
      %130 = vmatprep.subr.mxu0 0.0
      %131 = vmatpush1.msra.mxu0 0.0
      %132 = vmatprep.subr.mxu0 0.0
      %133 = vmatpush1.msra.mxu0 0.0
      %134 = vmatprep.subr.mxu0 0.0
      %135 = vmatpush1.msra.mxu0 0.0
      %136 = vmatprep.subr.mxu0 0.0
      %137 = vmatpush1.msra.mxu0 0.0
      %138 = vmatprep.subr.mxu0 0.0
      %139 = vmatpush1.msra.mxu0 0.0
      %140 = vmatprep.subr.mxu0 0.0
      %141 = vmatpush1.msra.mxu0 0.0
      %142 = vmatprep.subr.mxu0 0.0
      %143 = vmatpush1.msra.mxu0 0.0
      %144 = vmatprep.subr.mxu0 0.0
      %145 = vmatpush1.msra.mxu0 0.0
      %146 = vmatprep.subr.mxu0 0.0
      %147 = vmatpush1.msra.mxu0 0.0
      %148 = vmatprep.subr.mxu0 0.0
      %149 = vmatpush1.msra.mxu0 0.0
      %150 = vmatprep.subr.mxu0 0.0
      %151 = vmatpush1.msra.mxu0 0.0
      %152 = vmatprep.subr.mxu0 0.0
      %153 = vmatpush1.msra.mxu0 0.0
      %154 = vmatprep.subr.mxu0 0.0
      %155 = vmatpush1.msra.mxu0 0.0
      %156 = vmatprep.subr.mxu0 0.0
      %157 = vmatpush1.msra.mxu0 0.0
      %158 = vmatprep.subr.mxu0 0.0
      %159 = vmatpush1.msra.mxu0 0.0
      %160 = vmatprep.subr.mxu0 0.0
      %161 = vmatpush1.msra.mxu0 0.0
      %162 = vmatprep.subr.mxu0 0.0
      %163 = vmatpush1.msra.mxu0 0.0
      %164 = vmatprep.subr.mxu0 0.0
      %165 = vmatpush1.msra.mxu0 0.0
      %166 = vmatprep.subr.mxu0 0.0
      %167 = vmatpush1.msra.mxu0 0.0
      %168 = vmatprep.subr.mxu0 0.0
      %169 = vmatpush1.msra.mxu0 0.0
      %170 = vmatprep.subr.mxu0 0.0
      %171 = vmatpush1.msra.mxu0 0.0
      %172 = vmatprep.subr.mxu0 0.0
      %173 = vmatpush1.msra.mxu0 0.0
      %174 = vmatprep.subr.mxu0 0.0
      %175 = vmatpush1.msra.mxu0 0.0
      %176 = vmatprep.subr.mxu0 0.0
      %177 = vmatpush1.msra.mxu0 0.0
      %178 = vmatprep.subr.mxu0 0.0
      %179 = vmatpush1.msra.mxu0 0.0
      %180 = vmatprep.subr.mxu0 0.0
      %181 = vmatpush1.msra.mxu0 0.0
      %182 = vmatprep.subr.mxu0 0.0
      %183 = vmatpush1.msra.mxu0 0.0
      %184 = vmatprep.subr.mxu0 0.0
      %185 = vmatpush1.msra.mxu0 0.0
      %186 = vmatprep.subr.mxu0 0.0
      %187 = vmatpush1.msra.mxu0 0.0
      %188 = vmatprep.subr.mxu0 0.0
      %189 = vmatpush1.msra.mxu0 0.0
      %190 = vmatprep.mubr.f32.mxu0 0.0
      %191 = vmatmul.mubr.f32.gmra.mrb[0].mxu0 %v124
      %v192 = vpop.f32.mrb[0].mxu0
      %v193 = vadd.f32 0.0, %v192
      %v194 = vpop.f32.mrb[0].mxu0
      %195 = vdwg.mxu0
      %v196 = vadd.f32 %v121, %v193
      %197 = vst [vmem:[#allocation2] sm:$0x1] %v196
      %v198 = vld [vmem:[#allocation2] sm:$0x1]
      %v199 = vmul.f32 %v198, 0.125
      %200 = vst [vmem:[#allocation6] sm:$0x1] %v199
    $region21: #{tpu_custom_call.1} parent=1 // pred_fallthru
      _
    // Predicated region
    $region22: #{tpu_custom_call.1} parent=1 // pred_check
      _
    $region23: #{tpu_custom_call.1} parent=1 // pred_check_branch
      %202 = sbr.rel (0) target = $region25
    $region24: #{tpu_custom_call.1} parent=1 // pred_region
      %s204 = ssub.s32 16, 16
      %205 = vsyncadd [#allocation5], %s204
      %s207 = sshll.u32 [#allocation6], 4
      %s208 = int_to_ptr.vmem [resolvable:$true] %s207
      %210 = dma.vmem_to_hbm [thread:$0]  %s208, 16, %s1, [#allocation5]
    $region25: #{tpu_custom_call.1} parent=1 // pred_fallthru
      _
    // Predicated region
    $region26: #{tpu_custom_call.1} parent=1 // pred_check
      _
    $region27: #{tpu_custom_call.1} parent=1 // pred_check_branch
      %212 = sbr.rel (0) target = $region29
    $region28: #{tpu_custom_call.1} parent=1 // pred_region
      %213 = dma.done [#allocation5], 16
    $region29: #{tpu_custom_call.1} parent=1 // pred_fallthru
      _
    %214 = vsyncpa [#allocation4], 1
    %215 = vsyncpa [#allocation5], 1

</llo_original>
